<compile_context>
chip_gen: v7x
topology: tpu7x:2x2x1
jax: 0.10.0
libtpu: 0.0.40
codegen_flags: <defaults>
</compile_context>

<pallas_src>
import functools

import jax
import jax.numpy as jnp
from jax.experimental import pallas as pl
from jax.experimental.pallas import tpu as pltpu

EPS = 1e-5

_B_TILE_MAX = 256                 # sublane tile (multiple of 8)
_T_TILE_MAX = 4096                # lane tile (multiple of 128), ~4 MiB f32 blocks
_VMEM_LIMIT_BYTES = 48 * 1024 * 1024


def _ptr_loss_kernel(alpha_ref, out_ref, acc_ref, carry_ref, *,
                     total_b, total_t, approx, t_partial, b_partial):
    """Process one (b_tile, t_tile) block of alpha.

    alpha_ref : [bt, tt] VMEM tile of alpha
    out_ref   : [1, 1] SMEM partial sum for this B block (written once, at the
                last T tile)
    acc_ref   : [bt, 128] VMEM accumulator (plain VPU adds every tile; reduced
                to a scalar only at the last T tile)
    carry_ref : [bt, 1] VMEM scratch: last column of the previous T tile.
    """
    bi = pl.program_id(0)
    ti = pl.program_id(1)
    nt = pl.num_programs(1)
    bt, tt = alpha_ref.shape

    a = alpha_ref[...].astype(jnp.float32)            # in-kernel cast (bf16 ok)

    if tt % 128 == 0:
        # ----------------------- fast (lane-aligned) path -------------------
        n_chunks = tt // 128

        @pl.when(ti == 0)
        def _():
            acc_ref[...] = jnp.zeros_like(acc_ref)
            carry_ref[...] = jnp.ones_like(carry_ref)   # deterministic init

        carry = carry_ref[...]                          # alpha[:, ti*tt - 1]
        rolled = pltpu.roll(a, shift=1, axis=1)         # rolled[:, t] = a[:, t-1]
        carry_ref[...] = rolled[:, 0:1]                 # == a[:, tt-1:tt]

        # Full-tile term; lane 0 uses the (wrong) wrapped-around prev and is
        # replaced below by a narrow column, so interior lanes need no mask.
        term = a * jnp.log(a * pl.reciprocal(rolled + EPS, approx=approx))

        # Correct lane-0 column for this tile:
        #   ti == 0 -> 0 (global t == 0 contributes no term)
        #   ti  > 0 -> alpha[:,0]*log(alpha[:,0]/(carry + eps))
        a0 = a[:, 0:1]
        right0 = a0 * jnp.log(a0 * pl.reciprocal(carry + EPS, approx=approx))
        col0 = jnp.where(ti == 0, jnp.zeros_like(a0), right0)
        lane128 = jax.lax.broadcasted_iota(jnp.int32, (bt, 128), 1)

        def _accumulate(t):
            # Chunked lane-folding: pure VPU adds into the (bt,128) accumulator.
            partial = jnp.where(lane128 == 0, col0, t[:, 0:128])
            for c in range(1, n_chunks):
                partial = partial + t[:, c * 128:(c + 1) * 128]
            acc_ref[...] += partial

        if t_partial:
            # Masking only on the (single) partial edge tile.
            @pl.when(ti < nt - 1)
            def _():
                _accumulate(term)

            @pl.when(ti == nt - 1)
            def _():
                g_t = ti * tt + jax.lax.broadcasted_iota(jnp.int32, (bt, tt), 1)
                _accumulate(jnp.where(g_t < total_t, term, 0.0))
        else:
            _accumulate(term)

        @pl.when(ti == nt - 1)
        def _():
            acc = acc_ref[...]
            if b_partial:
                # Row mask applied once per B block, not per element per tile.
                g_b = bi * bt + jax.lax.broadcasted_iota(jnp.int32, (bt, 128), 0)
                acc = jnp.where(g_b < total_b, acc, 0.0)
            out_ref[0, 0] = jnp.sum(acc)
    else:
        # ------------- fallback path: t_tile == T (tiny / unaligned T) ------
        # Single T tile per B block; generic masked reduction is fine here.
        prev = jnp.concatenate(
            [jnp.ones((bt, 1), jnp.float32), a[:, :tt - 1]], axis=1)
        term = a * jnp.log(a * pl.reciprocal(prev + EPS, approx=approx))
        lane = jax.lax.broadcasted_iota(jnp.int32, (bt, tt), 1)
        valid = lane >= 1
        if b_partial:
            g_b = bi * bt + jax.lax.broadcasted_iota(jnp.int32, (bt, tt), 0)
            valid = valid & (g_b < total_b)
        out_ref[0, 0] = jnp.sum(jnp.where(valid, term, 0.0))


def ptr_loss(alpha: jax.Array, *, b_tile: int | None = None,
             t_tile: int | None = None, approx_recip: bool = False,
             core_parallel: bool = False) -> jax.Array:
    """alpha: [B, T] CIF weights. Returns the scalar PTR loss (float32).

    approx_recip : use the EUP fast reciprocal (~2^-12 rel. error) inside the
                   log; validated below at a relaxed tolerance.
    core_parallel: shard the B grid axis across TensorCores (v7x).
    """
    assert alpha.ndim == 2, "alpha must be [B, T]"
    B, T = alpha.shape

    if b_tile is None:
        b_tile = B if B <= _B_TILE_MAX else _B_TILE_MAX
    if t_tile is None:
        if T % 128 == 0:
            t_tile = min(T, _T_TILE_MAX)
        elif T > 128:
            t_tile = min((T // 128) * 128, _T_TILE_MAX)
        else:
            t_tile = T                      # tiny / unaligned: single T block

    assert b_tile % 8 == 0 or b_tile == B, "b_tile must be a multiple of 8 or B"
    assert t_tile % 128 == 0 or t_tile == T, "t_tile must be a multiple of 128 or T"
    if t_tile % 128 != 0:
        assert t_tile >= T, "unaligned t_tile only supported as one full-T block"

    n_b = pl.cdiv(B, b_tile)
    n_t = pl.cdiv(T, t_tile)
    t_partial = (T % t_tile) != 0
    b_partial = (B % b_tile) != 0

    kernel = functools.partial(
        _ptr_loss_kernel, total_b=B, total_t=T, approx=approx_recip,
        t_partial=t_partial, b_partial=b_partial)

    dim_sem = ((pltpu.CORE_PARALLEL, pltpu.ARBITRARY) if core_parallel
               else ("parallel", "arbitrary"))

    partials = pl.pallas_call(
        kernel,
        out_shape=jax.ShapeDtypeStruct((n_b, 1), jnp.float32),
        grid_spec=pltpu.PrefetchScalarGridSpec(
            num_scalar_prefetch=0,
            grid=(n_b, n_t),                                   # T (reduction) last
            in_specs=[pl.BlockSpec((b_tile, t_tile), lambda bi, ti: (bi, ti))],
            out_specs=pl.BlockSpec((1, 1), lambda bi, ti: (bi, 0),
                                   memory_space=pltpu.SMEM),
            scratch_shapes=[pltpu.VMEM((b_tile, 128), jnp.float32),  # acc
                            pltpu.VMEM((b_tile, 1), jnp.float32)],   # carry
        ),
        compiler_params=pltpu.CompilerParams(
            dimension_semantics=dim_sem,
            vmem_limit_bytes=_VMEM_LIMIT_BYTES),
        cost_estimate=pl.CostEstimate(
            flops=6 * B * T,
            transcendentals=2 * B * T,
            bytes_accessed=B * T * alpha.dtype.itemsize + n_b * 4),
    )(alpha)

    # per-row ptr = -sum(term); loss = sum over rows / B
    return -jnp.sum(partials) / jnp.float32(B)


def ptr_loss_ref(alpha: jax.Array) -> jax.Array:
    """Pure-JAX reference mirroring the PyTorch forward (f32 compute)."""
    alpha = alpha.astype(jnp.float32)
    prev = alpha[:, :-1]
    post = alpha[:, 1:]
    ptr = post * jnp.log(post / (prev + EPS))
    ptr = -jnp.sum(ptr, axis=-1)
    return jnp.sum(ptr) / ptr.shape[0]


if __name__ == "__main__":
    key = jax.random.PRNGKey(0)
    k1, k2, k3, k4 = jax.random.split(key, 4)

    # 1) Module-scale shape (B=2, T=8): unaligned single-block fallback path.
    a_small = jax.random.uniform(k1, (2, 8), dtype=jnp.float32,
                                 minval=0.05, maxval=1.0)
    out = jax.block_until_ready(ptr_loss(a_small))
    ref = jax.block_until_ready(ptr_loss_ref(a_small))
    assert jnp.allclose(out, ref, rtol=1e-5, atol=1e-5), (out, ref)

    # 2) Tiled path: cross-tile carry, partial B block and partial T block.
    a_mid = jax.random.uniform(k2, (10, 640), dtype=jnp.float32,
                               minval=0.05, maxval=1.0)
    out = jax.block_until_ready(ptr_loss(a_mid, b_tile=8, t_tile=256))
    ref = jax.block_until_ready(ptr_loss_ref(a_mid))
    assert jnp.allclose(out, ref, rtol=1e-4, atol=1e-3), (out, ref)

    # 3) Default tile selection, single aligned full-T tile.
    a_big = jax.random.uniform(k3, (16, 2048), dtype=jnp.float32,
                               minval=0.05, maxval=1.0)
    out = jax.block_until_ready(ptr_loss(a_big))
    ref = jax.block_until_ready(ptr_loss_ref(a_big))
    assert jnp.allclose(out, ref, rtol=1e-4, atol=1e-3), (out, ref)

    # 4) bf16 input (cast to f32 in-kernel), tiled path.
    a_bf16 = jax.random.uniform(k4, (8, 640), dtype=jnp.float32,
                                minval=0.05, maxval=1.0).astype(jnp.bfloat16)
    out = jax.block_until_ready(ptr_loss(a_bf16, t_tile=256))
    ref = jax.block_until_ready(ptr_loss_ref(a_bf16))
    assert jnp.allclose(out, ref, rtol=2e-4, atol=1e-3), (out, ref)

    # 5) Approx-reciprocal fast path (review suggestion) at relaxed tolerance.
    out_ax = jax.block_until_ready(
        ptr_loss(a_mid, b_tile=8, t_tile=256, approx_recip=True))
    ref_m = jax.block_until_ready(ptr_loss_ref(a_mid))
    assert jnp.abs(out_ax - ref_m) <= 5e-3 * jnp.abs(ref_m) + 1e-3, (out_ax, ref_m)

    print("KERNEL_OK")
</pallas_src>

<mosaic_0001>
module attributes {stable_mosaic.version = 11 : i64} {
  func.func @_ptr_loss_kernel(%arg0: i32, %arg1: i32, %arg2: memref<2x8xf32, #tpu.memory_space<vmem>>, %arg3: memref<1x1xf32, #tpu.memory_space<smem>>, %arg4: memref<2x128xf32, #tpu.memory_space<vmem>>, %arg5: memref<2x1xf32, #tpu.memory_space<vmem>>) attributes {dimension_semantics = [#tpu.dimension_semantics<parallel>, #tpu.dimension_semantics<arbitrary>], iteration_bounds = array<i64: 1, 1>, scalar_prefetch = 0 : i64, scratch_operands = 2 : i64, tpu.core_type = #tpu.core_type<tc>, window_params = [{transform_indices = @transform_0, window_bounds = array<i64: 2, 8>}, {transform_indices = @transform_1, window_bounds = array<i64: 1, 1>}]} {
    %c0 = arith.constant 0 : index
    %c0_0 = arith.constant 0 : index
    %0 = vector.load %arg2[%c0, %c0_0] : memref<2x8xf32, #tpu.memory_space<vmem>>, vector<2x8xf32>
    %cst = arith.constant 1.000000e+00 : f32
    %1 = vector.broadcast %cst : f32 to vector<2x1xf32>
    %2 = vector.extract_strided_slice %0 {offsets = [0, 0], sizes = [2, 7], strides = [1, 1]} : vector<2x8xf32> to vector<2x7xf32>
    %3 = tpu.concatenate %1, %2 in 1 : vector<2x1xf32>, vector<2x7xf32> -> vector<2x8xf32>
    %cst_1 = arith.constant 9.99999974E-6 : f32
    %4 = vector.broadcast %cst_1 : f32 to vector<2x8xf32>
    %5 = arith.addf %3, %4 : vector<2x8xf32>
    %6 = tpu.reciprocal %5 : vector<2x8xf32> -> vector<2x8xf32>
    %7 = arith.mulf %0, %6 : vector<2x8xf32>
    %8 = math.log %7 : vector<2x8xf32>
    %9 = arith.mulf %0, %8 : vector<2x8xf32>
    %10 = tpu.iota {dimensions = array<i32: 1>} : vector<2x8xi32>
    %c1_i32 = arith.constant 1 : i32
    %11 = vector.broadcast %c1_i32 : i32 to vector<2x8xi32>
    %12 = arith.cmpi sge, %10, %11 : vector<2x8xi32>
    %cst_2 = arith.constant 0.000000e+00 : f32
    %13 = vector.broadcast %cst_2 : f32 to vector<2x8xf32>
    %14 = arith.select %12, %9, %13 : vector<2x8xi1>, vector<2x8xf32>
    %15 = vector.shape_cast %14 : vector<2x8xf32> to vector<1x2x8xf32>
    %cst_3 = arith.constant dense<0.000000e+00> : vector<1xf32>
    %16 = vector.multi_reduction <add>, %15, %cst_3 [1, 2] : vector<1x2x8xf32> to vector<1xf32>
    %17 = vector.shape_cast %16 : vector<1xf32> to vector<1x1x1xf32>
    %18 = vector.extract %17[0, 0, 0] : f32 from vector<1x1x1xf32>
    %c0_4 = arith.constant 0 : index
    %c0_5 = arith.constant 0 : index
    %19 = memref.load %arg3[%c0_4, %c0_5] : memref<1x1xf32, #tpu.memory_space<smem>>
    memref.store %18, %arg3[%c0_4, %c0_5] : memref<1x1xf32, #tpu.memory_space<smem>>
    return
  }
  func.func @transform_0(%arg0: i32, %arg1: i32) -> (i32, i32) {
    %c0_i32 = arith.constant 0 : i32
    return %arg0, %arg1 : i32, i32
  }
  func.func @transform_1(%arg0: i32, %arg1: i32) -> (i32, i32) {
    %c0_i32 = arith.constant 0 : i32
    %c0_i32_0 = arith.constant 0 : i32
    return %arg0, %c0_i32 : i32, i32
  }
}

</mosaic_0001>

<llo_original>
// kernel: tpu_custom_call.1
$region0: #{tpu_custom_call.1}
  #allocation0 [shape = 'u32[]', space=smem, size = 0x4, offset = 0x4, fixed_abs, tag = 'smem constant byte address 0x4 - core index']
  #allocation1 [shape = 'u32[144,128]{1,0:T(1,128)}', space=vmem, size = 0x12000, scoped, tag = 'internal scratch']
  #allocation2 [shape = 'f32[2,128]{1,0:T(2,128)}', space=vmem, size = 0x400, scoped, tag = 'scratch operand']
  #allocation3 [shape = 'f32[2,1]{1,0:T(2,128)}', space=vmem, size = 0x400, scoped, tag = 'scratch operand']
  %s0 = inlined_call_operand.hbm [shape: f32[2,8], index: 0, kind: input, shape index: {}]
  %s1 = inlined_call_operand.hbm [shape: f32[1,1], index: 1, kind: output, shape index: {}]
  %s2 = sld [smem:[#allocation0]]
  $region18: #{tpu_custom_call.1} parent=0
    _
  %s4 = ssub.s32 1, %s2
  %s5 = scalar_select 0, %s4, %s2
  $region1: #{tpu_custom_call.1} parent=0
    #allocation4 [shape = 'u8[1024]{0}', space=vmem, size = 0x400, scoped, tag = 'input window, operand 0, single buffered']
    #allocation5 [shape = 's32[1]{0}', space=sflag, size = 0x4, scoped, tag = 'scoped memory for tpu_custom_call.1']
    #allocation6 [shape = 's32[1]{0}', space=sflag, size = 0x4, scoped, tag = 'scoped memory for tpu_custom_call.1']
    #allocation7 [shape = 'u8[512]{0}', space=smem, size = 0x200, scoped, tag = 'output window, operand 0, single buffered']
    %6 = vsyncpa [#allocation5], 0
    %7 = vsyncpa [#allocation6], 0
    // Predicated region
    $region2: #{tpu_custom_call.1} parent=1 // pred_check
      _
    $region3: #{tpu_custom_call.1} parent=1 // pred_check_branch
      %9 = sbr.rel (0) target = $region5
    $region4: #{tpu_custom_call.1} parent=1 // pred_region
      %s11 = ssub.s32 32, 32
      %12 = vsyncadd [#allocation5], %s11
      %s14 = sshll.u32 [#allocation4], 4
      %s15 = int_to_ptr.vmem [resolvable:$true] %s14
      %17 = dma.hbm_to_vmem [thread:$0]  %s0, 32, %s15, [#allocation5]
    $region5: #{tpu_custom_call.1} parent=1 // pred_fallthru
      _
    // Predicated region
    $region6: #{tpu_custom_call.1} parent=1 // pred_check
      _
    $region7: #{tpu_custom_call.1} parent=1 // pred_check_branch
      %19 = sbr.rel (0) target = $region9
    $region8: #{tpu_custom_call.1} parent=1 // pred_region
      %20 = dma.done [#allocation5], 32
    $region9: #{tpu_custom_call.1} parent=1 // pred_fallthru
      _
    %v21 = vld [vmem:[#allocation4] sm:$0x3]
    %23 = vrot.lane.b32.xlu0 %v21, 1
    %v24 = vpop.permute.xlu0 %23
    %vm26 = vcmask 7168
    %v27 = vsel %vm26, 1.0, %v24
    %v28 = vadd.f32 %v27, 1e-05
    %v29 = vrcp.pop %v28
    %v30 = vmul.f32 %v21, %v29
    %v31 = vlog2.pop %v30
    %v32 = vmul.f32 %v31, 0.6931472
    %v33 = vmul.f32 %v21, %v32
    %v34 = vlaneseq
    %v35 = vand.u32 %v34, 127
    %vm36 = vcmp.ge.s32.totalorder %v35, 1
    %v37 = vsel %vm36, %v33, 0.0
    %vm38 = vcmask 58368
    %v39 = vsel %vm38, %v37, 0.0
    %40 = vadd.xlane.f32.xlu0 %v39
    %v41 = vpop.xlane.xlu0 %40
    %v42 = vrot.slane %v41, 4
    %v43 = vadd.f32 %v41, %v42
    %v44 = vrot.slane %v43, 2
    %v45 = vadd.f32 %v43, %v44
    %v46 = vrot.slane %v45, 1
    %v47 = vadd.f32 %v45, %v46
    %s48 = vtos %v47
    %s49 = scalar_lea.smem [#allocation7], 0
    %50 = sst [smem:[%s49]] %s48
    // Predicated region
    $region10: #{tpu_custom_call.1} parent=1 // pred_check
      _
    $region11: #{tpu_custom_call.1} parent=1 // pred_check_branch
      %52 = sbr.rel (0) target = $region13
    $region12: #{tpu_custom_call.1} parent=1 // pred_region
      %s54 = ssub.s32 16, 16
      %55 = vsyncadd [#allocation6], %s54
      %58 = dma.smem_to_hbm [#allocation7], 16, %s1, [#allocation6]
    $region13: #{tpu_custom_call.1} parent=1 // pred_fallthru
      _
    // Predicated region
    $region14: #{tpu_custom_call.1} parent=1 // pred_check
      _
    $region15: #{tpu_custom_call.1} parent=1 // pred_check_branch
      %60 = sbr.rel (0) target = $region17
    $region16: #{tpu_custom_call.1} parent=1 // pred_region
      %61 = dma.done [#allocation6], 16
    $region17: #{tpu_custom_call.1} parent=1 // pred_fallthru
      _
    %62 = sfence
    %63 = vsyncpa [#allocation5], 1
    %64 = vsyncpa [#allocation6], 1

</llo_original>
